<compile_context>
chip_gen: v7x
topology: tpu7x:2x2x1
jax: 0.10.0
libtpu: 0.0.40
codegen_flags: <defaults>
</compile_context>

<pallas_src>
import functools

import numpy as np

import jax
import jax.numpy as jnp
from jax.experimental import pallas as pl
from jax.experimental.pallas import tpu as pltpu


def _gemhpp_kernel(p_ref, x_ref, a_ref, o_ref, *, eps, dot_dtype):
    """Fused GeM over all bins for one NC tile.

    p_ref : SMEM (1,) f32        -- learnable exponent p
    x_ref : VMEM [T, HW]         -- input tile (lane axis = HW, dense)
    a_ref : VMEM [HW, P_pad]     -- block-diagonal averaging matrix (all bins)
    o_ref : VMEM [T, P_pad]      -- per-bin GeM results (lane-dense, padded)
    """
    p = p_ref[0]
    x = jnp.maximum(x_ref[...].astype(jnp.float32), eps)        # clamp(min=eps)
    # x >= eps > 0, so x^p == exp(p*log(x)); single log+exp pass per element.
    xp = jnp.exp(p * jnp.log(x))                                 # [T, HW] f32
    # Segmented per-bin mean for every bin at once via the MXU.
    # bf16 operands (native MXU pass) with f32 accumulation.
    mean = jnp.dot(xp.astype(dot_dtype), a_ref[...],
                   preferred_element_type=jnp.float32)           # [T, P_pad]
    inv_p = 1.0 / p
    # Final ^(1/p) only on the tiny reduced result.
    o_ref[...] = jnp.exp(inv_p * jnp.log(mean)).astype(o_ref.dtype)


@functools.lru_cache(maxsize=None)
def _averaging_matrix_np(hw, bin_num, p_pad):
    """A[:, col] averages the spatial group belonging to (bin, group) `col`.

    Columns ordered exactly like torch.cat over bin_num. Padded columns
    replicate the last real column (finite; sliced away by the caller).
    Cached per (hw, bins, p_pad) so the host-side build runs once.
    """
    cols = []
    for b in bin_num:
        m = hw // b
        cols.append(np.repeat(np.eye(b, dtype=np.float32), m, axis=0) / float(m))
    a = np.concatenate(cols, axis=1)                      # [hw, P]
    p_real = a.shape[1]
    if p_pad > p_real:
        a = np.pad(a, ((0, 0), (0, p_pad - p_real)), mode="edge")
    return a


def _row_align(itemsize):
    # Native sublane packing: f32 -> 8, bf16 -> 16, 8-bit -> 32 rows.
    if itemsize >= 4:
        return 8
    if itemsize == 2:
        return 16
    return 32


def _vmem_capacity_bytes():
    try:
        info = pltpu.get_tpu_info()
        cap = getattr(info, "vmem_capacity_bytes", None)
        if cap:
            return int(cap)
    except Exception:
        pass
    return 128 << 20  # v5e/v6e default


def _pick_tile_nc(nc, hw, p_pad, itemsize, a_itemsize, buf_budget_bytes,
                  target_input_bytes=3 << 20, min_grid_steps=4):
    """NC tile that fits the FULL per-step VMEM footprint and keeps >=4 steps."""
    align = _row_align(itemsize)
    # Per-row VMEM cost, counting everything a grid step allocates:
    #   2x double-buffered input  : 2*hw*itemsize
    #   2x double-buffered output : 2*p_pad*itemsize
    #   f32 in-kernel temporaries x and xp (dtype-independent): 2*hw*4
    per_row = 2 * hw * itemsize + 2 * p_pad * itemsize + 2 * hw * 4
    # A has a constant index_map (Pallas skips the re-DMA but allocates 2 bufs).
    fixed = 2 * hw * p_pad * a_itemsize
    rows_budget = max(align, (buf_budget_bytes - fixed) // max(1, per_row))
    # ~2-4 MiB input tiles already reach ~85% of HBM roofline; bigger buys nothing.
    rows_target = max(align, target_input_bytes // max(1, hw * itemsize))
    t = min(rows_budget, rows_target)
    t = max(align, (t // align) * align)
    # Keep >= min_grid_steps grid steps (DMA overlap + v7x 2-TC sharding).
    step_cap = -(-nc // min_grid_steps)                     # cdiv
    step_cap = max(align, ((step_cap + align - 1) // align) * align)
    t = min(t, step_cap)
    nc_al = ((nc + align - 1) // align) * align
    return int(min(t, nc_al))


def gemhpp(x, p, bin_num=(64,), eps=1e-6, dot_dtype=jnp.bfloat16):
    """Pallas GeMHPP forward.

    x : [n, c, h, w]   (float32 or bf16)
    p : [1] float32    (learnable exponent)
    returns [n, c, sum(bin_num)]  (x.dtype)
    """
    n, c, h, w = x.shape
    hw = h * w
    for b in bin_num:
        assert hw % b == 0, f"h*w={hw} must be divisible by bin {b}"
    nc = n * c
    p_total = int(sum(bin_num))
    p_pad = max(128, ((p_total + 127) // 128) * 128)      # lane-dense output width

    a_itemsize = jnp.dtype(dot_dtype).itemsize
    a_mat = jnp.asarray(_averaging_matrix_np(hw, tuple(bin_num), p_pad),
                        dtype=dot_dtype)                  # [hw, P_pad]

    itemsize = jnp.dtype(x.dtype).itemsize
    cap = _vmem_capacity_bytes()
    # User-buffer budget: ~28 MiB on v7x (64 MiB VMEM/TC), ~48 MiB on v5e/v6e.
    buf_budget = min(48 << 20, max(16 << 20, cap // 2 - (4 << 20)))
    vmem_limit = int(min(cap - (8 << 20), buf_budget + (16 << 20)))

    tile_nc = _pick_tile_nc(nc, hw, p_pad, itemsize, a_itemsize, buf_budget)
    nc_pad = ((nc + tile_nc - 1) // tile_nc) * tile_nc

    xr = x.reshape(nc, hw)
    if nc_pad > nc:
        # Pad rows with 1.0 (clamp/log-safe); padded rows are sliced away below.
        xr = jnp.pad(xr, ((0, nc_pad - nc), (0, 0)), constant_values=1.0)

    grid = (nc_pad // tile_nc,)

    cost = pl.CostEstimate(
        flops=int(2 * nc_pad * hw * p_pad),
        transcendentals=int(2 * nc_pad * (hw + p_pad)),
        bytes_accessed=int(nc_pad * hw * itemsize
                           + nc_pad * p_pad * itemsize
                           + hw * p_pad * a_itemsize),
    )

    out_full = pl.pallas_call(
        functools.partial(_gemhpp_kernel, eps=eps, dot_dtype=dot_dtype),
        out_shape=jax.ShapeDtypeStruct((nc_pad, p_pad), x.dtype),
        grid=grid,
        in_specs=[
            pl.BlockSpec(memory_space=pltpu.MemorySpace.SMEM),      # p scalar
            pl.BlockSpec((tile_nc, hw), lambda i: (i, 0)),          # x tile
            pl.BlockSpec((hw, p_pad), lambda i: (0, 0)),            # A (const idx)
        ],
        out_specs=pl.BlockSpec((tile_nc, p_pad), lambda i: (i, 0)),
        compiler_params=pltpu.CompilerParams(
            dimension_semantics=("parallel",),   # v7x: shard NC over both TCs
            vmem_limit_bytes=vmem_limit,
        ),
        cost_estimate=cost,
    )(p, xr, a_mat)

    return out_full[:nc, :p_total].reshape(n, c, p_total)


def gemhpp_ref(x, p, bin_num=(64,), eps=1e-6):
    """Pure-JAX reference mirroring the PyTorch forward."""
    n, c, h, w = x.shape
    pv = p[0]
    feats = []
    for b in bin_num:
        z = x.reshape(n, c, b, -1)
        z = jnp.maximum(z, eps)
        z = jnp.mean(z ** pv, axis=-1)
        z = z ** (1.0 / pv)
        feats.append(z)
    return jnp.concatenate(feats, axis=-1)


if __name__ == "__main__":
    key = jax.random.PRNGKey(0)
    n, c, h, w = 2, 4, 16, 16                  # h*w = 256
    x = jax.random.uniform(key, (n, c, h, w), dtype=jnp.float32)

    # Deterministic parameter init per module __init__: p = 6.5
    p = jnp.ones((1,), dtype=jnp.float32) * 6.5

    # bf16 MXU pass introduces ~1e-3 rel error on the per-bin mean, shrunk by
    # the ^(1/p) root -> a few 1e-4 on the output; compare with relaxed tol.
    rtol, atol = 3e-3, 1e-4

    # Default config: bin_num = (64,)
    bin_num = (64,)
    out = jax.block_until_ready(gemhpp(x, p, bin_num=bin_num))
    ref = gemhpp_ref(x, p, bin_num=bin_num)
    assert out.shape == (n, c, sum(bin_num)), out.shape
    assert jnp.allclose(out, ref, rtol=rtol, atol=atol), (
        float(jnp.max(jnp.abs(out - ref))))

    # Multi-bin config exercises the fused (single-pass) path.
    bin_num2 = (16, 64)
    out2 = jax.block_until_ready(gemhpp(x, p, bin_num=bin_num2))
    ref2 = gemhpp_ref(x, p, bin_num=bin_num2)
    assert out2.shape == (n, c, sum(bin_num2)), out2.shape
    assert jnp.allclose(out2, ref2, rtol=rtol, atol=atol), (
        float(jnp.max(jnp.abs(out2 - ref2))))

    print("KERNEL_OK")
</pallas_src>

<mosaic_0001>
module attributes {stable_mosaic.version = 11 : i64} {
  func.func @_gemhpp_kernel(%arg0: i32, %arg1: memref<1xf32, #tpu.memory_space<smem>>, %arg2: memref<8x256xf32, #tpu.memory_space<vmem>>, %arg3: memref<256x128xbf16, #tpu.memory_space<vmem>>, %arg4: memref<8x128xf32, #tpu.memory_space<vmem>>) attributes {dimension_semantics = [#tpu.dimension_semantics<parallel>], iteration_bounds = array<i64: 1>, scalar_prefetch = 0 : i64, scratch_operands = 0 : i64, tpu.core_type = #tpu.core_type<tc>, window_params = [{transform_indices = @transform_0, window_bounds = array<i64: 1>}, {transform_indices = @transform_1, window_bounds = array<i64: 8, 256>}, {pipeline_mode = #tpu.pipeline_mode<synchronous>, transform_indices = @transform_2, window_bounds = array<i64: 256, 128>}, {transform_indices = @transform_3, window_bounds = array<i64: 8, 128>}]} {
    %c0 = arith.constant 0 : index
    %0 = memref.load %arg1[%c0] : memref<1xf32, #tpu.memory_space<smem>>
    %c0_0 = arith.constant 0 : index
    %c0_1 = arith.constant 0 : index
    %1 = vector.load %arg2[%c0_0, %c0_1] : memref<8x256xf32, #tpu.memory_space<vmem>>, vector<8x256xf32>
    %cst = arith.constant 9.99999997E-7 : f32
    %2 = vector.broadcast %cst : f32 to vector<8x256xf32>
    %3 = arith.maximumf %1, %2 : vector<8x256xf32>
    %4 = math.log %3 : vector<8x256xf32>
    %5 = vector.broadcast %0 : f32 to vector<8x256xf32>
    %6 = arith.mulf %5, %4 : vector<8x256xf32>
    %7 = math.exp %6 : vector<8x256xf32>
    %8 = arith.truncf %7 : vector<8x256xf32> to vector<8x256xbf16>
    %c0_2 = arith.constant 0 : index
    %c0_3 = arith.constant 0 : index
    %9 = vector.load %arg3[%c0_2, %c0_3] : memref<256x128xbf16, #tpu.memory_space<vmem>>, vector<256x128xbf16>
    %cst_4 = arith.constant dense<0.000000e+00> : vector<8x128xf32>
    %10 = tpu.matmul %8, %9, %cst_4 {dimension_numbers = #tpu.dot_dimension_numbers<[1], [0], [0], [1], [0, 0, 1, 1], [], []>} : vector<8x256xbf16>, vector<256x128xbf16>, vector<8x128xf32> -> vector<8x128xf32>
    %cst_5 = arith.constant 1.000000e+00 : f32
    %11 = arith.divf %cst_5, %0 : f32
    %12 = math.log %10 : vector<8x128xf32>
    %13 = vector.broadcast %11 : f32 to vector<8x128xf32>
    %14 = arith.mulf %13, %12 : vector<8x128xf32>
    %15 = math.exp %14 : vector<8x128xf32>
    %c0_6 = arith.constant 0 : index
    %c0_7 = arith.constant 0 : index
    %16 = vector.load %arg4[%c0_6, %c0_7] : memref<8x128xf32, #tpu.memory_space<vmem>>, vector<8x128xf32>
    tpu.vector_store %arg4[%c0_6, %c0_7], %15 {strides = array<i32>} : memref<8x128xf32, #tpu.memory_space<vmem>>, vector<8x128xf32>,
    return
  }
  func.func @transform_0(%arg0: i32) -> i32 {
    %c0_i32 = arith.constant 0 : i32
    %c0_i32_0 = arith.constant 0 : i32
    return %c0_i32 : i32
  }
  func.func @transform_1(%arg0: i32) -> (i32, i32) {
    %c0_i32 = arith.constant 0 : i32
    %c0_i32_0 = arith.constant 0 : i32
    return %arg0, %c0_i32 : i32, i32
  }
  func.func @transform_2(%arg0: i32) -> (i32, i32) {
    %c0_i32 = arith.constant 0 : i32
    %c0_i32_0 = arith.constant 0 : i32
    %c0_i32_1 = arith.constant 0 : i32
    return %c0_i32, %c0_i32_0 : i32, i32
  }
  func.func @transform_3(%arg0: i32) -> (i32, i32) {
    %c0_i32 = arith.constant 0 : i32
    %c0_i32_0 = arith.constant 0 : i32
    return %arg0, %c0_i32 : i32, i32
  }
}

</mosaic_0001>

<llo_original>
// kernel: tpu_custom_call.1
$region0: #{tpu_custom_call.1}
  #allocation0 [shape = 'u32[]', space=smem, size = 0x4, offset = 0x4, fixed_abs, tag = 'smem constant byte address 0x4 - core index']
  #allocation1 [shape = 'u32[144,128]{1,0:T(1,128)}', space=vmem, size = 0x12000, scoped, tag = 'internal scratch']
  #allocation2 [shape = 'f32[1]{0:T(128)S(6)}', space=smem, size = 0x200, scoped, tag = 'scoped memory for tpu_custom_call.1']
  %s0 = inlined_call_operand.<no memory space> [shape: f32[1], index: 0, kind: input, shape index: {}]
  %s1 = inlined_call_operand.hbm [shape: f32[8,256], index: 1, kind: input, shape index: {}]
  %s2 = inlined_call_operand.hbm [shape: bf16[256,128], index: 2, kind: input, shape index: {}]
  %s3 = inlined_call_operand.hbm [shape: f32[8,128], index: 3, kind: output, shape index: {}]
  %s4 = sld [smem:[#allocation0]]
  $region30: #{tpu_custom_call.1} parent=0
    _
  %s6 = ssub.s32 1, %s4
  %s7 = scalar_select 0, %s6, %s4
  %8 = sst [smem:[#allocation2]] %s0
  $region1: #{tpu_custom_call.1} parent=0
    #allocation3 [shape = 'u8[8192]{0}', space=vmem, size = 0x2000, scoped, tag = 'input window, operand 1, single buffered']
    #allocation4 [shape = 's32[1]{0}', space=sflag, size = 0x4, scoped, tag = 'scoped memory for tpu_custom_call.1']
    #allocation5 [shape = 's32[1]{0}', space=sflag, size = 0x4, scoped, tag = 'scoped memory for tpu_custom_call.1']
    #allocation6 [shape = 'u8[65536]{0}', space=vmem, size = 0x10000, scoped, tag = 'input window, operand 2, single buffered']
    #allocation7 [shape = 's32[1]{0}', space=sflag, size = 0x4, scoped, tag = 'scoped memory for tpu_custom_call.1']
    #allocation8 [shape = 'u8[4096]{0}', space=vmem, size = 0x1000, scoped, tag = 'output window, operand 0, single buffered']
    %9 = vsyncpa [#allocation4], 0
    %10 = vsyncpa [#allocation7], 0
    %11 = vsyncpa [#allocation5], 0
    // Predicated region
    $region2: #{tpu_custom_call.1} parent=1 // pred_check
      _
    $region3: #{tpu_custom_call.1} parent=1 // pred_check_branch
      %13 = sbr.rel (0) target = $region5
    $region4: #{tpu_custom_call.1} parent=1 // pred_region
      _
    $region5: #{tpu_custom_call.1} parent=1 // pred_fallthru
      _
    // Predicated region
    $region6: #{tpu_custom_call.1} parent=1 // pred_check
      _
    $region7: #{tpu_custom_call.1} parent=1 // pred_check_branch
      %15 = sbr.rel (0) target = $region9
    $region8: #{tpu_custom_call.1} parent=1 // pred_region
      %s17 = ssub.s32 256, 256
      %18 = vsyncadd [#allocation4], %s17
      %s20 = sshll.u32 [#allocation3], 4
      %s21 = int_to_ptr.vmem [resolvable:$true] %s20
      %23 = dma.hbm_to_vmem [thread:$0]  %s1, 256, %s21, [#allocation4]
    $region9: #{tpu_custom_call.1} parent=1 // pred_fallthru
      _
    // Predicated region
    $region10: #{tpu_custom_call.1} parent=1 // pred_check
      _
    $region11: #{tpu_custom_call.1} parent=1 // pred_check_branch
      %25 = sbr.rel (0) target = $region13
    $region12: #{tpu_custom_call.1} parent=1 // pred_region
      %s27 = ssub.s32 2048, 2048
      %28 = vsyncadd [#allocation7], %s27
      %s29 = sshll.u32 [#allocation6], 4
      %s30 = int_to_ptr.vmem [resolvable:$true] %s29
      %35 = dma.hbm_to_vmem [thread:$0]  %s2, 2048, %s30, [#allocation7], 64, 64, 4
    $region13: #{tpu_custom_call.1} parent=1 // pred_fallthru
      _
    // Predicated region
    $region14: #{tpu_custom_call.1} parent=1 // pred_check
      _
    $region15: #{tpu_custom_call.1} parent=1 // pred_check_branch
      %37 = sbr.rel (0) target = $region17
    $region16: #{tpu_custom_call.1} parent=1 // pred_region
      %38 = dma.done [#allocation4], 256
    $region17: #{tpu_custom_call.1} parent=1 // pred_fallthru
      _
    // Predicated region
    $region18: #{tpu_custom_call.1} parent=1 // pred_check
      _
    $region19: #{tpu_custom_call.1} parent=1 // pred_check_branch
      %40 = sbr.rel (0) target = $region21
    $region20: #{tpu_custom_call.1} parent=1 // pred_region
      %41 = dma.done [#allocation7], 2048
    $region21: #{tpu_custom_call.1} parent=1 // pred_fallthru
      _
    %s43 = sld [smem:[#allocation2]]
    %v44 = vld [vmem:[#allocation3] sm:$0xff]
    %v45 = vld [vmem:[#allocation3 + $0x8] sm:$0xff]
    %v46 = vmax.f32 %v44, 1e-06
    %v47 = vmax.f32 %v45, 1e-06
    %v48 = vlog2.pop %v46
    %v49 = vmul.f32 %v48, 0.6931472
    %v50 = vlog2.pop %v47
    %v51 = vmul.f32 %v50, 0.6931472
    %v52 = vstv %s43
    %v53 = vmul.f32 %v52, %v49
    %v54 = vmul.f32 %v52, %v51
    %v55 = vmul.f32 %v53, 1.442695
    %v56 = vpow.pop %v55
    %v57 = vmul.f32 %v54, 1.442695
    %v58 = vpow.pop %v57
    %v59 = vpack.c.bf16 %v56, %v56
    %v60 = vpack.c.bf16 %v58, %v58
    %v61 = vld [vmem:[#allocation6] sm:$0xf]
    %v62 = vld [vmem:[#allocation6 + $0x4] sm:$0xf]
    %v63 = vld [vmem:[#allocation6 + $0x8] sm:$0xf]
    %v64 = vld [vmem:[#allocation6 + $0xc] sm:$0xf]
    %v65 = vld [vmem:[#allocation6 + $0x10] sm:$0xf]
    %v66 = vld [vmem:[#allocation6 + $0x14] sm:$0xf]
    %v67 = vld [vmem:[#allocation6 + $0x18] sm:$0xf]
    %v68 = vld [vmem:[#allocation6 + $0x1c] sm:$0xf]
    %v69 = vld [vmem:[#allocation6 + $0x20] sm:$0xf]
    %v70 = vld [vmem:[#allocation6 + $0x24] sm:$0xf]
    %v71 = vld [vmem:[#allocation6 + $0x28] sm:$0xf]
    %v72 = vld [vmem:[#allocation6 + $0x2c] sm:$0xf]
    %v73 = vld [vmem:[#allocation6 + $0x30] sm:$0xf]
    %v74 = vld [vmem:[#allocation6 + $0x34] sm:$0xf]
    %v75 = vld [vmem:[#allocation6 + $0x38] sm:$0xf]
    %v76 = vld [vmem:[#allocation6 + $0x3c] sm:$0xf]
    %v77 = vld [vmem:[#allocation6 + $0x40] sm:$0xf]
    %v78 = vld [vmem:[#allocation6 + $0x44] sm:$0xf]
    %v79 = vld [vmem:[#allocation6 + $0x48] sm:$0xf]
    %v80 = vld [vmem:[#allocation6 + $0x4c] sm:$0xf]
    %v81 = vld [vmem:[#allocation6 + $0x50] sm:$0xf]
    %v82 = vld [vmem:[#allocation6 + $0x54] sm:$0xf]
    %v83 = vld [vmem:[#allocation6 + $0x58] sm:$0xf]
    %v84 = vld [vmem:[#allocation6 + $0x5c] sm:$0xf]
    %v85 = vld [vmem:[#allocation6 + $0x60] sm:$0xf]
    %v86 = vld [vmem:[#allocation6 + $0x64] sm:$0xf]
    %v87 = vld [vmem:[#allocation6 + $0x68] sm:$0xf]
    %v88 = vld [vmem:[#allocation6 + $0x6c] sm:$0xf]
    %v89 = vld [vmem:[#allocation6 + $0x70] sm:$0xf]
    %v90 = vld [vmem:[#allocation6 + $0x74] sm:$0xf]
    %v91 = vld [vmem:[#allocation6 + $0x78] sm:$0xf]
    %v92 = vld [vmem:[#allocation6 + $0x7c] sm:$0xf]
    %v125 = vunpack.c.l.b16 %v61
    %v126 = vunpack.c.l.b16 %v62
    %v127 = vunpack.c.l.b16 %v63
    %v128 = vunpack.c.l.b16 %v64
    %v129 = vunpack.c.l.b16 %v65
    %v130 = vunpack.c.l.b16 %v66
    %v131 = vunpack.c.l.b16 %v67
    %v132 = vunpack.c.l.b16 %v68
    %v133 = vunpack.c.l.b16 %v69
    %v134 = vunpack.c.l.b16 %v70
    %v135 = vunpack.c.l.b16 %v71
    %v136 = vunpack.c.l.b16 %v72
    %v137 = vunpack.c.l.b16 %v73
    %v138 = vunpack.c.l.b16 %v74
    %v139 = vunpack.c.l.b16 %v75
    %v140 = vunpack.c.l.b16 %v76
    %v141 = vunpack.c.l.b16 %v77
    %v142 = vunpack.c.l.b16 %v78
    %v143 = vunpack.c.l.b16 %v79
    %v144 = vunpack.c.l.b16 %v80
    %v145 = vunpack.c.l.b16 %v81
    %v146 = vunpack.c.l.b16 %v82
    %v147 = vunpack.c.l.b16 %v83
    %v148 = vunpack.c.l.b16 %v84
    %v149 = vunpack.c.l.b16 %v85
    %v150 = vunpack.c.l.b16 %v86
    %v151 = vunpack.c.l.b16 %v87
    %v152 = vunpack.c.l.b16 %v88
    %v153 = vunpack.c.l.b16 %v89
    %v154 = vunpack.c.l.b16 %v90
    %v155 = vunpack.c.l.b16 %v91
    %v156 = vunpack.c.l.b16 %v92
    %v157 = vpack.c.b16 %v126, %v125
    %v158 = vpack.c.b16 %v128, %v127
    %v159 = vpack.c.b16 %v130, %v129
    %v160 = vpack.c.b16 %v132, %v131
    %v161 = vpack.c.b16 %v134, %v133
    %v162 = vpack.c.b16 %v136, %v135
    %v163 = vpack.c.b16 %v138, %v137
    %v164 = vpack.c.b16 %v140, %v139
    %v165 = vpack.c.b16 %v142, %v141
    %v166 = vpack.c.b16 %v144, %v143
    %v167 = vpack.c.b16 %v146, %v145
    %v168 = vpack.c.b16 %v148, %v147
    %v169 = vpack.c.b16 %v150, %v149
    %v170 = vpack.c.b16 %v152, %v151
    %v171 = vpack.c.b16 %v154, %v153
    %v172 = vpack.c.b16 %v156, %v155
    %189 = vmatprep.subr.bf16.mxu0 0
    %190 = vmatpush1.bf16.msra.mxu0 %v157
    %191 = vmatprep.subr.bf16.mxu0 0
    %192 = vmatpush1.bf16.msra.mxu0 %v158
    %193 = vmatprep.subr.bf16.mxu0 0
    %194 = vmatpush1.bf16.msra.mxu0 %v159
    %195 = vmatprep.subr.bf16.mxu0 0
    %196 = vmatpush1.bf16.msra.mxu0 %v160
    %197 = vmatprep.subr.bf16.mxu0 0
    %198 = vmatpush1.bf16.msra.mxu0 %v161
    %199 = vmatprep.subr.bf16.mxu0 0
    %200 = vmatpush1.bf16.msra.mxu0 %v162
    %201 = vmatprep.subr.bf16.mxu0 0
    %202 = vmatpush1.bf16.msra.mxu0 %v163
    %203 = vmatprep.subr.bf16.mxu0 0
    %204 = vmatpush1.bf16.msra.mxu0 %v164
    %205 = vmatprep.subr.bf16.mxu0 0
    %206 = vmatpush1.bf16.msra.mxu0 %v165
    %207 = vmatprep.subr.bf16.mxu0 0
    %208 = vmatpush1.bf16.msra.mxu0 %v166
    %209 = vmatprep.subr.bf16.mxu0 0
    %210 = vmatpush1.bf16.msra.mxu0 %v167
    %211 = vmatprep.subr.bf16.mxu0 0
    %212 = vmatpush1.bf16.msra.mxu0 %v168
    %213 = vmatprep.subr.bf16.mxu0 0
    %214 = vmatpush1.bf16.msra.mxu0 %v169
    %215 = vmatprep.subr.bf16.mxu0 0
    %216 = vmatpush1.bf16.msra.mxu0 %v170
    %217 = vmatprep.subr.bf16.mxu0 0
    %218 = vmatpush1.bf16.msra.mxu0 %v171
    %219 = vmatprep.subr.bf16.mxu0 0
    %220 = vmatpush1.bf16.msra.mxu0 %v172
    %221 = vmatprep.mubr.bf16.mxu0 %v60
    %222 = vmatmul.mubr.bf16.gmra.mrb[0].mxu0 %v59
    %v223 = vpop.f32.mrb[0].mxu0
    %v224 = vadd.f32 0.0, %v223
    %v225 = vpop.f32.mrb[0].mxu0
    %v226 = vpop.f32.mrb[0].mxu0
    %v227 = vpop.f32.mrb[0].mxu0
    %228 = vdwg.mxu0
    %v229 = vstv %s43
    %v230 = vrcp.pop %v229
    %s231 = vtos %v230
    %v232 = vlog2.pop %v224
    %v233 = vmul.f32 %v232, 0.6931472
    %v234 = vstv %s231
    %v235 = vmul.f32 %v234, %v233
    %v236 = vmul.f32 %v235, 1.442695
    %v237 = vpow.pop %v236
    %238 = vst [vmem:[#allocation8] sm:$0xff] %v237
    // Predicated region
    $region22: #{tpu_custom_call.1} parent=1 // pred_check
      _
    $region23: #{tpu_custom_call.1} parent=1 // pred_check_branch
      %240 = sbr.rel (0) target = $region25
    $region24: #{tpu_custom_call.1} parent=1 // pred_region
      %s242 = ssub.s32 128, 128
      %243 = vsyncadd [#allocation5], %s242
      %s245 = sshll.u32 [#allocation8], 4
      %s246 = int_to_ptr.vmem [resolvable:$true] %s245
      %248 = dma.vmem_to_hbm [thread:$0]  %s246, 128, %s3, [#allocation5]
    $region25: #{tpu_custom_call.1} parent=1 // pred_fallthru
      _
    // Predicated region
    $region26: #{tpu_custom_call.1} parent=1 // pred_check
      _
    $region27: #{tpu_custom_call.1} parent=1 // pred_check_branch
      %250 = sbr.rel (0) target = $region29
    $region28: #{tpu_custom_call.1} parent=1 // pred_region
      %251 = dma.done [#allocation5], 128
    $region29: #{tpu_custom_call.1} parent=1 // pred_fallthru
      _
    %252 = vsyncpa [#allocation4], 1
    %253 = vsyncpa [#allocation7], 1
    %254 = vsyncpa [#allocation5], 1

</llo_original>
